<compile_context>
chip_gen: v5e
topology: v5e:2x2
jax: 0.10.0
libtpu: 0.0.40
codegen_flags: <defaults>
</compile_context>

<pallas_src>
import functools

import jax
import jax.numpy as jnp
from jax.experimental import pallas as pl
from jax.experimental.pallas import tpu as pltpu


def _round_up(n, m):
    return ((n + m - 1) // m) * m


# ----------------------------------------------------------------------------
# One-time weight preparation (hoisted out of the per-call path).
# PyTorch Linear weights are [out, in] f32; we store them padded, transposed,
# bf16 [in, out] with out-dims rounded up to 128 (lane-dense intermediates).
# Zero padding is mathematically inert: tanh(0)=0 rows feed zero weight rows.
# ----------------------------------------------------------------------------
def prepare_encoder_weights(w1, w2, w3):
    H1, in_f = w1.shape
    H2 = w2.shape[0]
    latent = w3.shape[0]
    HP1 = _round_up(H1, 128)
    HP2 = _round_up(H2, 128)
    LP = _round_up(latent, 128)
    bf16 = jnp.bfloat16
    w1p = jnp.zeros((in_f, HP1), bf16).at[:, :H1].set(w1.T.astype(bf16))
    w2p = jnp.zeros((HP1, HP2), bf16).at[:H1, :H2].set(w2.T.astype(bf16))
    w3p = jnp.zeros((HP2, LP), bf16).at[:H2, :latent].set(w3.T.astype(bf16))
    return w1p, w2p, w3p


def _default_tb(B):
    # Large tiles for big B (amortize ~0.35 us per-grid-step overhead), but keep
    # >= 2 grid steps when possible so v7x can shard batch tiles across its 2 TCs.
    if B <= 32:
        return _round_up(B, 16)
    half = _round_up(-(-B // 2), 16)
    return min(512, half)


# ----------------------------------------------------------------------------
# Kernel: fused data_reorg + 3 matmuls (bf16 MXU operands, f32 accumulation)
# + tanh/tanh/ReLU + 0.005 epilogue.  x tile stays f32 for the reorg math.
# ----------------------------------------------------------------------------
def _encoder_kernel(x_ref, w1_ref, w2_ref, w3_ref, o_ref, *, apply_reorg):
    x = x_ref[...]                                       # [TB, IN] f32
    if apply_reorg:
        xd = x * jnp.float32(1.0 / 40.0)
        s = jnp.sum(xd * xd, axis=1, keepdims=True)      # [TB, 1]
        safe = jnp.where(s == 0.0, 1.0, s)
        t = jnp.where(s == 0.0, 1.0, jnp.tanh(s) / safe)
        x = xd * t
    xb = x.astype(jnp.bfloat16)
    # layer1: Linear(IN -> H1, bias=False) + Tanh
    h1 = jnp.tanh(jnp.dot(xb, w1_ref[...], preferred_element_type=jnp.float32))
    # layer2: Linear(H1 -> H2, bias=False) + Tanh
    h2 = jnp.tanh(jnp.dot(h1.astype(jnp.bfloat16), w2_ref[...],
                          preferred_element_type=jnp.float32))
    # layer3: Linear(H2 -> latent, bias=False)
    h3 = jnp.dot(h2.astype(jnp.bfloat16), w3_ref[...],
                 preferred_element_type=jnp.float32)
    # layer4: ReLU, then + 0.005 (padded lanes discarded by the wrapper slice).
    o_ref[...] = jnp.maximum(h3, 0.0) + 0.005


@functools.partial(jax.jit, static_argnames=("latent", "tb", "apply_reorg"))
def encoder_forward(x, w1p, w2p, w3p, *, latent, tb=None, apply_reorg=True):
    """Forward pass.  x: [B, input_size] f32 (raw data if apply_reorg=True);
    w*p: padded bf16 [in, out] from prepare_encoder_weights.  Returns [B, latent] f32."""
    B, in_f = x.shape
    HP1 = w1p.shape[1]
    HP2 = w2p.shape[1]
    LP = w3p.shape[1]

    if tb is None:
        tb = _default_tb(B)
    tb = min(tb, _round_up(B, 16))        # never tile wider than the (padded) batch

    Bp = _round_up(B, tb)
    if Bp != B:                            # tail-only pad; skipped when aligned
        x = jnp.pad(x, ((0, Bp - B), (0, 0)))

    grid = (Bp // tb,)

    w_bytes = (w1p.size + w2p.size + w3p.size) * 2
    flops = 2 * Bp * (in_f * HP1 + HP1 * HP2 + HP2 * LP)
    transcendentals = Bp * (HP1 + HP2 + (1 if apply_reorg else 0))
    bytes_accessed = x.size * 4 + w_bytes + Bp * LP * 4   # weights fetched once (resident)

    # Scoped VMEM derived from the actual tile plan: double-buffered x/out tiles,
    # resident (double-buffered) weights, f32 intermediates, plus headroom.
    # Clamped to <= 32 MiB so it also fits v7x's 64 MiB physical VMEM.
    vmem = (2 * (tb * in_f * 4 + tb * LP * 4)
            + 2 * w_bytes
            + 4 * tb * max(HP1, HP2, LP) * 4
            + (4 << 20))
    vmem = min(max(vmem, 8 << 20), 32 << 20)

    kernel = functools.partial(_encoder_kernel, apply_reorg=apply_reorg)

    out_padded = pl.pallas_call(
        kernel,
        out_shape=jax.ShapeDtypeStruct((Bp, LP), jnp.float32),
        grid_spec=pltpu.PrefetchScalarGridSpec(
            num_scalar_prefetch=0,
            grid=grid,
            in_specs=[
                pl.BlockSpec((tb, in_f), lambda i: (i, 0)),   # batch-tiled x (f32)
                pl.BlockSpec(w1p.shape, lambda i: (0, 0)),    # resident bf16 weights
                pl.BlockSpec(w2p.shape, lambda i: (0, 0)),
                pl.BlockSpec(w3p.shape, lambda i: (0, 0)),
            ],
            out_specs=pl.BlockSpec((tb, LP), lambda i: (i, 0)),
        ),
        compiler_params=pltpu.CompilerParams(
            dimension_semantics=("parallel",),   # shard batch tiles across TCs (v7x)
            vmem_limit_bytes=vmem,
        ),
        cost_estimate=pl.CostEstimate(
            flops=flops,
            transcendentals=transcendentals,
            bytes_accessed=bytes_accessed,
        ),
    )(x, w1p, w2p, w3p)

    # Strip only what was actually padded.
    if Bp == B:
        return out_padded[:, :latent]
    return out_padded[:B, :latent]


# Plain-JAX data_reorg (reference only; the kernel fuses this in its prologue),
# with a guard against all-zero rows (tanh(s)/s is NaN at s == 0).
def data_reorg(data):
    data = data / 40.0
    s = jnp.sum(jnp.square(data), axis=1)
    safe = jnp.where(s == 0.0, 1.0, s)
    t = jnp.where(s == 0.0, 1.0, jnp.tanh(s) / safe)
    return data * t[:, jnp.newaxis]


if __name__ == "__main__":
    # Shapes consistent with the module:
    #   input_size = 32, args.layers = [64, 48], latent_size = 4**2 = 16
    B, INPUT, H1, H2, LATENT = 256, 32, 64, 48, 16

    key = jax.random.PRNGKey(0)
    kx, k1, k2, k3 = jax.random.split(key, 4)

    x_raw = jax.random.normal(kx, (B, INPUT), dtype=jnp.float32)

    # Deterministic parameter init (PyTorch Linear weight shape is [out, in]).
    def init_w(k, out_f, in_f):
        bound = 1.0 / jnp.sqrt(in_f)
        return jax.random.uniform(
            k, (out_f, in_f), minval=-bound, maxval=bound, dtype=jnp.float32
        )

    w1 = init_w(k1, H1, INPUT)
    w2 = init_w(k2, H2, H1)
    w3 = init_w(k3, LATENT, H2)

    # One-time weight prep (not part of the per-call path).
    w1p, w2p, w3p = jax.block_until_ready(prepare_encoder_weights(w1, w2, w3))

    # Fused data_reorg + encoder forward in a single Pallas kernel.
    out = encoder_forward(x_raw, w1p, w2p, w3p, latent=LATENT)
    out = jax.block_until_ready(out)

    # Reference check in plain f32 JAX (kernel uses bf16 MXU operands with f32
    # accumulation, so the tolerance is relaxed accordingly).
    x_ref = data_reorg(x_raw)
    ref = jnp.maximum(jnp.tanh(jnp.tanh(x_ref @ w1.T) @ w2.T) @ w3.T, 0.0) + 0.005

    assert out.shape == (B, LATENT)
    assert bool(jnp.all(jnp.isfinite(out)))
    assert jnp.allclose(out, ref, atol=3e-2, rtol=3e-2), (
        f"max abs err = {float(jnp.max(jnp.abs(out - ref)))}"
    )

    print("KERNEL_OK")
</pallas_src>

<mosaic_0001>
module attributes {stable_mosaic.version = 11 : i64} {
  func.func @_encoder_kernel(%arg0: i32, %arg1: memref<128x32xf32, #tpu.memory_space<vmem>>, %arg2: memref<32x128xbf16, #tpu.memory_space<vmem>>, %arg3: memref<128x128xbf16, #tpu.memory_space<vmem>>, %arg4: memref<128x128xbf16, #tpu.memory_space<vmem>>, %arg5: memref<128x128xf32, #tpu.memory_space<vmem>>) attributes {dimension_semantics = [#tpu.dimension_semantics<parallel>], iteration_bounds = array<i64: 2>, scalar_prefetch = 0 : i64, scratch_operands = 0 : i64, tpu.core_type = #tpu.core_type<tc>, window_params = [{transform_indices = @transform_0, window_bounds = array<i64: 128, 32>}, {pipeline_mode = #tpu.pipeline_mode<synchronous>, transform_indices = @transform_1, window_bounds = array<i64: 32, 128>}, {pipeline_mode = #tpu.pipeline_mode<synchronous>, transform_indices = @transform_2, window_bounds = array<i64: 128, 128>}, {pipeline_mode = #tpu.pipeline_mode<synchronous>, transform_indices = @transform_3, window_bounds = array<i64: 128, 128>}, {transform_indices = @transform_4, window_bounds = array<i64: 128, 128>}]} {
    %c0 = arith.constant 0 : index
    %c0_0 = arith.constant 0 : index
    %0 = vector.load %arg1[%c0, %c0_0] : memref<128x32xf32, #tpu.memory_space<vmem>>, vector<128x32xf32>
    %cst = arith.constant 2.500000e-02 : f32
    %1 = vector.broadcast %cst : f32 to vector<128x32xf32>
    %2 = arith.mulf %0, %1 : vector<128x32xf32>
    %3 = arith.mulf %2, %2 : vector<128x32xf32>
    %cst_1 = arith.constant dense<0.000000e+00> : vector<128xf32>
    %4 = vector.multi_reduction <add>, %3, %cst_1 [1] : vector<128x32xf32> to vector<128xf32>
    %5 = vector.shape_cast %4 : vector<128xf32> to vector<128x1xf32>
    %cst_2 = arith.constant 0.000000e+00 : f32
    %6 = vector.broadcast %cst_2 : f32 to vector<128x1xf32>
    %7 = arith.cmpf oeq, %5, %6 : vector<128x1xf32>
    %cst_3 = arith.constant 1.000000e+00 : f32
    %8 = vector.broadcast %cst_3 : f32 to vector<128x1xf32>
    %9 = arith.select %7, %8, %5 : vector<128x1xi1>, vector<128x1xf32>
    %cst_4 = arith.constant 0.000000e+00 : f32
    %10 = vector.broadcast %cst_4 : f32 to vector<128x1xf32>
    %11 = arith.cmpf oeq, %5, %10 : vector<128x1xf32>
    %12 = math.tanh %5 : vector<128x1xf32>
    %13 = arith.divf %12, %9 : vector<128x1xf32>
    %cst_5 = arith.constant 1.000000e+00 : f32
    %14 = vector.broadcast %cst_5 : f32 to vector<128x1xf32>
    %15 = arith.select %11, %14, %13 : vector<128x1xi1>, vector<128x1xf32>
    %16 = vector.broadcast %15 : vector<128x1xf32> to vector<128x32xf32>
    %17 = arith.mulf %2, %16 : vector<128x32xf32>
    %18 = arith.truncf %17 : vector<128x32xf32> to vector<128x32xbf16>
    %c0_6 = arith.constant 0 : index
    %c0_7 = arith.constant 0 : index
    %19 = vector.load %arg2[%c0_6, %c0_7] : memref<32x128xbf16, #tpu.memory_space<vmem>>, vector<32x128xbf16>
    %cst_8 = arith.constant dense<0.000000e+00> : vector<128x128xf32>
    %20 = tpu.matmul %18, %19, %cst_8 {dimension_numbers = #tpu.dot_dimension_numbers<[1], [0], [0], [1], [0, 0, 1, 1], [], []>} : vector<128x32xbf16>, vector<32x128xbf16>, vector<128x128xf32> -> vector<128x128xf32>
    %21 = math.tanh %20 : vector<128x128xf32>
    %22 = arith.truncf %21 : vector<128x128xf32> to vector<128x128xbf16>
    %c0_9 = arith.constant 0 : index
    %c0_10 = arith.constant 0 : index
    %23 = vector.load %arg3[%c0_9, %c0_10] : memref<128x128xbf16, #tpu.memory_space<vmem>>, vector<128x128xbf16>
    %cst_11 = arith.constant dense<0.000000e+00> : vector<128x128xf32>
    %24 = tpu.matmul %22, %23, %cst_11 {dimension_numbers = #tpu.dot_dimension_numbers<[1], [0], [0], [1], [0, 0, 1, 1], [], []>} : vector<128x128xbf16>, vector<128x128xbf16>, vector<128x128xf32> -> vector<128x128xf32>
    %25 = math.tanh %24 : vector<128x128xf32>
    %26 = arith.truncf %25 : vector<128x128xf32> to vector<128x128xbf16>
    %c0_12 = arith.constant 0 : index
    %c0_13 = arith.constant 0 : index
    %27 = vector.load %arg4[%c0_12, %c0_13] : memref<128x128xbf16, #tpu.memory_space<vmem>>, vector<128x128xbf16>
    %cst_14 = arith.constant dense<0.000000e+00> : vector<128x128xf32>
    %28 = tpu.matmul %26, %27, %cst_14 {dimension_numbers = #tpu.dot_dimension_numbers<[1], [0], [0], [1], [0, 0, 1, 1], [], []>} : vector<128x128xbf16>, vector<128x128xbf16>, vector<128x128xf32> -> vector<128x128xf32>
    %cst_15 = arith.constant 0.000000e+00 : f32
    %29 = vector.broadcast %cst_15 : f32 to vector<128x128xf32>
    %30 = arith.maximumf %28, %29 : vector<128x128xf32>
    %cst_16 = arith.constant 5.000000e-03 : f32
    %31 = vector.broadcast %cst_16 : f32 to vector<128x128xf32>
    %32 = arith.addf %30, %31 : vector<128x128xf32>
    %c0_17 = arith.constant 0 : index
    %c0_18 = arith.constant 0 : index
    %33 = vector.load %arg5[%c0_17, %c0_18] : memref<128x128xf32, #tpu.memory_space<vmem>>, vector<128x128xf32>
    tpu.vector_store %arg5[%c0_17, %c0_18], %32 {strides = array<i32>} : memref<128x128xf32, #tpu.memory_space<vmem>>, vector<128x128xf32>,
    return
  }
  func.func @transform_0(%arg0: i32) -> (i32, i32) {
    %c0_i32 = arith.constant 0 : i32
    %c0_i32_0 = arith.constant 0 : i32
    return %arg0, %c0_i32 : i32, i32
  }
  func.func @transform_1(%arg0: i32) -> (i32, i32) {
    %c0_i32 = arith.constant 0 : i32
    %c0_i32_0 = arith.constant 0 : i32
    %c0_i32_1 = arith.constant 0 : i32
    return %c0_i32, %c0_i32_0 : i32, i32
  }
  func.func @transform_2(%arg0: i32) -> (i32, i32) {
    %c0_i32 = arith.constant 0 : i32
    %c0_i32_0 = arith.constant 0 : i32
    %c0_i32_1 = arith.constant 0 : i32
    return %c0_i32, %c0_i32_0 : i32, i32
  }
  func.func @transform_3(%arg0: i32) -> (i32, i32) {
    %c0_i32 = arith.constant 0 : i32
    %c0_i32_0 = arith.constant 0 : i32
    %c0_i32_1 = arith.constant 0 : i32
    return %c0_i32, %c0_i32_0 : i32, i32
  }
  func.func @transform_4(%arg0: i32) -> (i32, i32) {
    %c0_i32 = arith.constant 0 : i32
    %c0_i32_0 = arith.constant 0 : i32
    return %arg0, %c0_i32 : i32, i32
  }
}

</mosaic_0001>

<llo_original>
// kernel: encoder_forward.1
$region0: #{encoder_forward.1}
  #allocation0 [shape = 'u32[]', space=smem, size = 0x4, offset = 0x4, fixed_abs, tag = 'smem constant byte address 0x4 - core index']
  #allocation1 [shape = 'u32[72,128]{1,0:T(1,128)}', space=vmem, size = 0x9000, scoped, tag = 'internal scratch']
  %s0 = inlined_call_operand.vmem [shape: f32[256,32], index: 0, kind: input, shape index: {}]
  %s1 = inlined_call_operand.vmem [shape: bf16[32,128], index: 1, kind: input, shape index: {}]
  %s2 = inlined_call_operand.vmem [shape: bf16[128,128], index: 2, kind: input, shape index: {}]
  %s3 = inlined_call_operand.vmem [shape: bf16[128,128], index: 3, kind: input, shape index: {}]
  %s4 = inlined_call_operand.vmem [shape: f32[256,128], index: 4, kind: output, shape index: {}]
  %s5 = sld [smem:[#allocation0]]
  $region49: #{encoder_forward.1} parent=0
    _
  %s7 = ssub.s32 1, %s5
  %s8 = scalar_select 0, %s7, %s5
  loop: start=0, step=1, limit=4
  $region2: #{encoder_forward.1} parent=0 // loop_pre_header
    _
  $region3: #{encoder_forward.1} parent=0 // loop_header
    %s10 = sphi 0, %s14
    %p11 = scmp.ge.s32.totalorder %s10, 4
    %s20 = sphi 0, %s22
    %s23 = sphi 0, %s20
    %s24 = sphi 0, %s23
    %s40 = sphi 0, %s24
    %s44 = sphi 0, %s44
    %s46 = sphi 0, %s44
    %s47 = sphi 0, %s46
    %s61 = sphi 0, %s47
    %s65 = sphi 0, %s65
    %s67 = sphi 0, %s65
    %s68 = sphi 0, %s67
    %s82 = sphi 0, %s68
    %s86 = sphi 0, %s86
    %s88 = sphi 0, %s86
    %s89 = sphi 0, %s88
    %s103 = sphi 0, %s89
    %s109 = sphi 0, %s111
    %s112 = sphi 0, %s109
    %s113 = sphi 0, %s112
    %s129 = sphi 0, %s113
  $region4: #{encoder_forward.1} parent=0 // loop_header_branch
    %13 = sbr.rel (%p11) target = $region8
  $region5: #{encoder_forward.1} parent=0 // loop_body
    %s15 = ssub.s32 %s10, 1
    %s16 = ssub.s32 %s10, 2
    %s17 = sadd.s32 %s10, 1
    %s18 = ssub.s32 %s10, %s17
    %p19 = scmp.eq.s32.totalorder %s18, 0
    %s21 = sadd.s32 %s20, 1
    %s22 = scalar_select %p19, %s20, %s21
    %p25 = pneg %p19
    %p26 = scmp.eq.s32.totalorder %s10, 1
    %p27 = por %p25, %p26
    %p28 = scmp.ne.s32.totalorder %s20, %s23
    %p29 = scmp.eq.s32.totalorder %s10, 0
    %p30 = por %p28, %p29
    %p31 = scmp.ne.s32.totalorder %s20, %s23
    %p32 = scmp.eq.s32.totalorder %s15, 1
    %p33 = por %p31, %p32
    %p34 = scmp.ne.s32.totalorder %s23, %s24
    %p35 = scmp.eq.s32.totalorder %s15, 0
    %p36 = por %p34, %p35
    %p37 = scmp.ne.s32.totalorder %s23, %s24
    %p38 = scmp.eq.s32.totalorder %s16, 1
    %p39 = por %p37, %p38
    %p41 = scmp.ne.s32.totalorder %s24, %s40
    %p42 = scmp.eq.s32.totalorder %s16, 0
    %p43 = por %p41, %p42
    %s45 = sadd.s32 %s44, 1
    %p48 = scmp.eq.s32.totalorder %s10, 1
    %p49 = scmp.ne.s32.totalorder %s44, %s46
    %p50 = scmp.eq.s32.totalorder %s10, 0
    %p51 = por %p49, %p50
    %p52 = scmp.ne.s32.totalorder %s44, %s46
    %p53 = scmp.eq.s32.totalorder %s15, 1
    %p54 = por %p52, %p53
    %p55 = scmp.ne.s32.totalorder %s46, %s47
    %p56 = scmp.eq.s32.totalorder %s15, 0
    %p57 = por %p55, %p56
    %p58 = scmp.ne.s32.totalorder %s46, %s47
    %p59 = scmp.eq.s32.totalorder %s16, 1
    %p60 = por %p58, %p59
    %p62 = scmp.ne.s32.totalorder %s47, %s61
    %p63 = scmp.eq.s32.totalorder %s16, 0
    %p64 = por %p62, %p63
    %s66 = sadd.s32 %s65, 1
    %p69 = scmp.eq.s32.totalorder %s10, 1
    %p70 = scmp.ne.s32.totalorder %s65, %s67
    %p71 = scmp.eq.s32.totalorder %s10, 0
    %p72 = por %p70, %p71
    %p73 = scmp.ne.s32.totalorder %s65, %s67
    %p74 = scmp.eq.s32.totalorder %s15, 1
    %p75 = por %p73, %p74
    %p76 = scmp.ne.s32.totalorder %s67, %s68
    %p77 = scmp.eq.s32.totalorder %s15, 0
    %p78 = por %p76, %p77
    %p79 = scmp.ne.s32.totalorder %s67, %s68
    %p80 = scmp.eq.s32.totalorder %s16, 1
    %p81 = por %p79, %p80
    %p83 = scmp.ne.s32.totalorder %s68, %s82
    %p84 = scmp.eq.s32.totalorder %s16, 0
    %p85 = por %p83, %p84
    %s87 = sadd.s32 %s86, 1
    %p90 = scmp.eq.s32.totalorder %s10, 1
    %p91 = scmp.ne.s32.totalorder %s86, %s88
    %p92 = scmp.eq.s32.totalorder %s10, 0
    %p93 = por %p91, %p92
    %p94 = scmp.ne.s32.totalorder %s86, %s88
    %p95 = scmp.eq.s32.totalorder %s15, 1
    %p96 = por %p94, %p95
    %p97 = scmp.ne.s32.totalorder %s88, %s89
    %p98 = scmp.eq.s32.totalorder %s15, 0
    %p99 = por %p97, %p98
    %p100 = scmp.ne.s32.totalorder %s88, %s89
    %p101 = scmp.eq.s32.totalorder %s16, 1
    %p102 = por %p100, %p101
    %p104 = scmp.ne.s32.totalorder %s89, %s103
    %p105 = scmp.eq.s32.totalorder %s16, 0
    %p106 = por %p104, %p105
    %s107 = ssub.s32 %s10, %s17
    %p108 = scmp.eq.s32.totalorder %s107, 0
    %s110 = sadd.s32 %s109, 1
    %s111 = scalar_select %p108, %s109, %s110
    %p114 = pneg %p108
    %p115 = scmp.eq.s32.totalorder %s10, 1
    %p116 = por %p114, %p115
    %p117 = scmp.ne.s32.totalorder %s109, %s112
    %p118 = scmp.eq.s32.totalorder %s10, 0
    %p119 = por %p117, %p118
    %p120 = scmp.ne.s32.totalorder %s109, %s112
    %p121 = scmp.eq.s32.totalorder %s15, 1
    %p122 = por %p120, %p121
    %p123 = scmp.ne.s32.totalorder %s112, %s113
    %p124 = scmp.eq.s32.totalorder %s15, 0
    %p125 = por %p123, %p124
    %p126 = scmp.ne.s32.totalorder %s112, %s113
    %p127 = scmp.eq.s32.totalorder %s16, 1
    %p128 = por %p126, %p127
    %p130 = scmp.ne.s32.totalorder %s113, %s129
    %p131 = scmp.eq.s32.totalorder %s16, 0
    %p132 = por %p130, %p131
    %p133 = scmp.le.s32.totalorder 1, %s10
    %p134 = scmp.lt.s32.totalorder %s10, 3
    %p135 = pnand %p133, %p134
    %p136 = pneg %p135
    // Predicated region
    $region9: #{encoder_forward.1} parent=5 // pred_check
      _
    $region10: #{encoder_forward.1} parent=5 // pred_check_branch
      %138 = sbr.rel (%p135) target = $region12
    $region11: #{encoder_forward.1} parent=5 // pred_region
      %s139 = ssub.s32 %s10, 1
      // Predicated region
      $region13: #{encoder_forward.1} parent=11 // pred_check
        %p140 = pneg %p57
      $region14: #{encoder_forward.1} parent=11 // pred_check_branch
        %142 = sbr.rel (%p140) target = $region16
      $region15: #{encoder_forward.1} parent=11 // pred_region
        _
      $region16: #{encoder_forward.1} parent=11 // pred_fallthru
        _
      // Predicated region
      $region17: #{encoder_forward.1} parent=11 // pred_check
        %p143 = pneg %p78
      $region18: #{encoder_forward.1} parent=11 // pred_check_branch
        %145 = sbr.rel (%p143) target = $region20
      $region19: #{encoder_forward.1} parent=11 // pred_region
        _
      $region20: #{encoder_forward.1} parent=11 // pred_fallthru
        _
      // Predicated region
      $region21: #{encoder_forward.1} parent=11 // pred_check
        %p146 = pneg %p99
      $region22: #{encoder_forward.1} parent=11 // pred_check_branch
        %148 = sbr.rel (%p146) target = $region24
      $region23: #{encoder_forward.1} parent=11 // pred_region
        _
      $region24: #{encoder_forward.1} parent=11 // pred_fallthru
        _
    $region12: #{encoder_forward.1} parent=5 // pred_fallthru
      _
    %p149 = scmp.lt.s32.totalorder %s10, 2
    // Predicated region
    $region25: #{encoder_forward.1} parent=5 // pred_check
      %p150 = pneg %p149
    $region26: #{encoder_forward.1} parent=5 // pred_check_branch
      %152 = sbr.rel (%p150) target = $region28
    $region27: #{encoder_forward.1} parent=5 // pred_region
      // Predicated region
      $region29: #{encoder_forward.1} parent=27 // pred_check
        %p153 = pneg %p30
      $region30: #{encoder_forward.1} parent=27 // pred_check_branch
        %155 = sbr.rel (%p153) target = $region32
      $region31: #{encoder_forward.1} parent=27 // pred_region
        %s156 = smul.u32 16, %s10
        %p157 = scmp.lt.s32.totalorder %s156, 31
        %s158 = scalar_select %p157, %s156, 31
        %s159 = smul.addr %s158, 8
        %s160 = scalar_lea.vmem %s0, %s159
        %s161 = smul.u32 16, %s10
      $region32: #{encoder_forward.1} parent=27 // pred_fallthru
        _
    $region28: #{encoder_forward.1} parent=5 // pred_fallthru
      _
    %p162 = scmp.le.s32.totalorder 1, %s10
    %p163 = scmp.lt.s32.totalorder %s10, 3
    %p164 = pnand %p162, %p163
    %p165 = pneg %p164
    // Predicated region
    $region33: #{encoder_forward.1} parent=5 // pred_check
      _
    $region34: #{encoder_forward.1} parent=5 // pred_check_branch
      %167 = sbr.rel (%p164) target = $region36
    $region35: #{encoder_forward.1} parent=5 // pred_region
      %s168 = ssub.s32 %s10, 1
      %s169 = smul.u32 16, %s15
      %p170 = scmp.lt.s32.totalorder %s169, 31
      %s171 = scalar_select %p170, %s169, 31
      %s172 = smul.addr %s171, 8
      %s173 = scalar_lea.vmem %s0, %s172
      %p174 = pneg %p36
      %p175 = pneg %p33
      %p176 = pneg %p57
      %p177 = pneg %p54
      %p178 = pneg %p78
      %p179 = pneg %p75
      %p180 = pneg %p99
      %p181 = pneg %p96
      %p182 = pneg %p125
      %p183 = pneg %p122
      %s184 = smul.u32 16, %s15
      %p185 = scmp.lt.s32.totalorder %s184, 31
      %s186 = scalar_select %p185, %s184, 31
      %s187 = smul.addr %s186, 8
      %s188 = scalar_lea.vmem %s4, %s187
      %s189 = smul.u32 16, %s15
      %p190 = scmp.lt.s32.totalorder %s189, 31
      %s191 = scalar_select %p190, %s189, 31
      %s192 = smul.addr %s191, 8
      %s193 = scalar_lea.vmem %s0, %s192
      %s194 = smul.u32 16, %s15
      %s195 = smul.u32 16, %s15
      %p196 = scmp.lt.s32.totalorder %s195, 31
      %s197 = scalar_select %p196, %s195, 31
      %s198 = smul.addr %s197, 8
      %s199 = scalar_lea.vmem %s4, %s198
      %s200 = smul.u32 16, %s15
      %v202 = vld [vmem:[%s193] sm:$0xff]
      %v203 = vld [vmem:[%s193 + $0x8] sm:$0xff]
      %v204 = vld [vmem:[%s193 + $0x10] sm:$0xff]
      %v205 = vld [vmem:[%s193 + $0x18] sm:$0xff]
      %v206 = vld [vmem:[%s193 + $0x20] sm:$0xff]
      %v207 = vld [vmem:[%s193 + $0x28] sm:$0xff]
      %v208 = vld [vmem:[%s193 + $0x30] sm:$0xff]
      %v209 = vld [vmem:[%s193 + $0x38] sm:$0xff]
      %v210 = vld [vmem:[%s193 + $0x40] sm:$0xff]
      %v211 = vld [vmem:[%s193 + $0x48] sm:$0xff]
      %v212 = vld [vmem:[%s193 + $0x50] sm:$0xff]
      %v213 = vld [vmem:[%s193 + $0x58] sm:$0xff]
      %v214 = vld [vmem:[%s193 + $0x60] sm:$0xff]
      %v215 = vld [vmem:[%s193 + $0x68] sm:$0xff]
      %v216 = vld [vmem:[%s193 + $0x70] sm:$0xff]
      %v217 = vld [vmem:[%s193 + $0x78] sm:$0xff]
      %v218 = vmul.f32 %v202, 0.025
      %v219 = vmul.f32 %v203, 0.025
      %v220 = vmul.f32 %v204, 0.025
      %v221 = vmul.f32 %v205, 0.025
      %v222 = vmul.f32 %v206, 0.025
      %v223 = vmul.f32 %v207, 0.025
      %v224 = vmul.f32 %v208, 0.025
      %v225 = vmul.f32 %v209, 0.025
      %v226 = vmul.f32 %v210, 0.025
      %v227 = vmul.f32 %v211, 0.025
      %v228 = vmul.f32 %v212, 0.025
      %v229 = vmul.f32 %v213, 0.025
      %v230 = vmul.f32 %v214, 0.025
      %v231 = vmul.f32 %v215, 0.025
      %v232 = vmul.f32 %v216, 0.025
      %v233 = vmul.f32 %v217, 0.025
      %v234 = vmul.f32 %v218, %v218
      %v235 = vmul.f32 %v219, %v219
      %v236 = vmul.f32 %v220, %v220
      %v237 = vmul.f32 %v221, %v221
      %v238 = vmul.f32 %v222, %v222
      %v239 = vmul.f32 %v223, %v223
      %v240 = vmul.f32 %v224, %v224
      %v241 = vmul.f32 %v225, %v225
      %v242 = vmul.f32 %v226, %v226
      %v243 = vmul.f32 %v227, %v227
      %v244 = vmul.f32 %v228, %v228
      %v245 = vmul.f32 %v229, %v229
      %v246 = vmul.f32 %v230, %v230
      %v247 = vmul.f32 %v231, %v231
      %v248 = vmul.f32 %v232, %v232
      %v249 = vmul.f32 %v233, %v233
      %vm250 = vcmask 261120
      %v251 = vsel %vm250, %v234, 0.0
      %252 = vadd.xlane.f32.xlu0 %v251
      %v253 = vpop.xlane.xlu0 %252
      %v254 = vsel %vm250, %v235, 0.0
      %255 = vadd.xlane.f32.xlu0 %v254
      %v256 = vpop.xlane.xlu0 %255
      %v257 = vsel %vm250, %v236, 0.0
      %258 = vadd.xlane.f32.xlu0 %v257
      %v259 = vpop.xlane.xlu0 %258
      %v260 = vsel %vm250, %v237, 0.0
      %261 = vadd.xlane.f32.xlu0 %v260
      %v262 = vpop.xlane.xlu0 %261
      %v263 = vsel %vm250, %v238, 0.0
      %264 = vadd.xlane.f32.xlu0 %v263
      %v265 = vpop.xlane.xlu0 %264
      %v266 = vsel %vm250, %v239, 0.0
      %267 = vadd.xlane.f32.xlu0 %v266
      %v268 = vpop.xlane.xlu0 %267
      %v269 = vsel %vm250, %v240, 0.0
      %270 = vadd.xlane.f32.xlu0 %v269
      %v271 = vpop.xlane.xlu0 %270
      %v272 = vsel %vm250, %v241, 0.0
      %273 = vadd.xlane.f32.xlu0 %v272
      %v274 = vpop.xlane.xlu0 %273
      %v275 = vsel %vm250, %v242, 0.0
      %276 = vadd.xlane.f32.xlu0 %v275
      %v277 = vpop.xlane.xlu0 %276
      %v278 = vsel %vm250, %v243, 0.0
      %279 = vadd.xlane.f32.xlu0 %v278
      %v280 = vpop.xlane.xlu0 %279
      %v281 = vsel %vm250, %v244, 0.0
      %282 = vadd.xlane.f32.xlu0 %v281
      %v283 = vpop.xlane.xlu0 %282
      %v284 = vsel %vm250, %v245, 0.0
      %285 = vadd.xlane.f32.xlu0 %v284
      %v286 = vpop.xlane.xlu0 %285
      %v287 = vsel %vm250, %v246, 0.0
      %288 = vadd.xlane.f32.xlu0 %v287
      %v289 = vpop.xlane.xlu0 %288
      %v290 = vsel %vm250, %v247, 0.0
      %291 = vadd.xlane.f32.xlu0 %v290
      %v292 = vpop.xlane.xlu0 %291
      %v293 = vsel %vm250, %v248, 0.0
      %294 = vadd.xlane.f32.xlu0 %v293
      %v295 = vpop.xlane.xlu0 %294
      %v296 = vsel %vm250, %v249, 0.0
      %297 = vadd.xlane.f32.xlu0 %v296
      %v298 = vpop.xlane.xlu0 %297
      %vm299 = vcmp.eq.f32.partialorder %v253, 0.0
      %vm300 = vcmp.eq.f32.partialorder %v256, 0.0
      %vm301 = vcmp.eq.f32.partialorder %v259, 0.0
      %vm302 = vcmp.eq.f32.partialorder %v262, 0.0
      %vm303 = vcmp.eq.f32.partialorder %v265, 0.0
      %vm304 = vcmp.eq.f32.partialorder %v268, 0.0
      %vm305 = vcmp.eq.f32.partialorder %v271, 0.0
      %vm306 = vcmp.eq.f32.partialorder %v274, 0.0
      %vm307 = vcmp.eq.f32.partialorder %v277, 0.0
      %vm308 = vcmp.eq.f32.partialorder %v280, 0.0
      %vm309 = vcmp.eq.f32.partialorder %v283, 0.0
      %vm310 = vcmp.eq.f32.partialorder %v286, 0.0
      %vm311 = vcmp.eq.f32.partialorder %v289, 0.0
      %vm312 = vcmp.eq.f32.partialorder %v292, 0.0
      %vm313 = vcmp.eq.f32.partialorder %v295, 0.0
      %vm314 = vcmp.eq.f32.partialorder %v298, 0.0
      %v315 = vsel %vm299, 1.0, %v253
      %v316 = vsel %vm300, 1.0, %v256
      %v317 = vsel %vm301, 1.0, %v259
      %v318 = vsel %vm302, 1.0, %v262
      %v319 = vsel %vm303, 1.0, %v265
      %v320 = vsel %vm304, 1.0, %v268
      %v321 = vsel %vm305, 1.0, %v271
      %v322 = vsel %vm306, 1.0, %v274
      %v323 = vsel %vm307, 1.0, %v277
      %v324 = vsel %vm308, 1.0, %v280
      %v325 = vsel %vm309, 1.0, %v283
      %v326 = vsel %vm310, 1.0, %v286
      %v327 = vsel %vm311, 1.0, %v289
      %v328 = vsel %vm312, 1.0, %v292
      %v329 = vsel %vm313, 1.0, %v295
      %v330 = vsel %vm314, 1.0, %v298
      %v331 = vtanh.pop %v253
      %v332 = vtanh.pop %v256
      %v333 = vtanh.pop %v259
      %v334 = vtanh.pop %v262
      %v335 = vtanh.pop %v265
      %v336 = vtanh.pop %v268
      %v337 = vtanh.pop %v271
      %v338 = vtanh.pop %v274
      %v339 = vtanh.pop %v277
      %v340 = vtanh.pop %v280
      %v341 = vtanh.pop %v283
      %v342 = vtanh.pop %v286
      %v343 = vtanh.pop %v289
      %v344 = vtanh.pop %v292
      %v345 = vtanh.pop %v295
      %v346 = vtanh.pop %v298
      %v347 = vrcp.pop %v315
      %v348 = vmul.f32 %v315, %v347
      %v349 = vsub.f32 1.0, %v348
      %v350 = vmul.f32 %v347, %v349
      %v351 = vadd.f32 %v347, %v350
      %vm352 = vweird.f32 %v315
      %vm353 = vweird.f32 %v347
      %vm354 = vmor %vm352, %vm353
      %v355 = vsel %vm354, %v347, %v351
      %v356 = vand.u32 2147483647, %v315
      %vm357 = vcmp.eq.f32.partialorder %v356, 8.507059e+37
      %v358 = vand.u32 %v315, 2147483648
      %v359 = vor.u32 1.1754944e-38, %v358
      %v360 = vsel %vm357, %v359, %v355
      %v361 = vmul.f32 %v331, %v360
      %v362 = vrcp.pop %v316
      %v363 = vmul.f32 %v316, %v362
      %v364 = vsub.f32 1.0, %v363
      %v365 = vmul.f32 %v362, %v364
      %v366 = vadd.f32 %v362, %v365
      %vm367 = vweird.f32 %v316
      %vm368 = vweird.f32 %v362
      %vm369 = vmor %vm367, %vm368
      %v370 = vsel %vm369, %v362, %v366
      %v371 = vand.u32 2147483647, %v316
      %vm372 = vcmp.eq.f32.partialorder %v371, 8.507059e+37
      %v373 = vand.u32 %v316, 2147483648
      %v374 = vor.u32 1.1754944e-38, %v373
      %v375 = vsel %vm372, %v374, %v370
      %v376 = vmul.f32 %v332, %v375
      %v377 = vrcp.pop %v317
      %v378 = vmul.f32 %v317, %v377
      %v379 = vsub.f32 1.0, %v378
      %v380 = vmul.f32 %v377, %v379
      %v381 = vadd.f32 %v377, %v380
      %vm382 = vweird.f32 %v317
      %vm383 = vweird.f32 %v377
      %vm384 = vmor %vm382, %vm383
      %v385 = vsel %vm384, %v377, %v381
      %v386 = vand.u32 2147483647, %v317
      %vm387 = vcmp.eq.f32.partialorder %v386, 8.507059e+37
      %v388 = vand.u32 %v317, 2147483648
      %v389 = vor.u32 1.1754944e-38, %v388
      %v390 = vsel %vm387, %v389, %v385
      %v391 = vmul.f32 %v333, %v390
      %v392 = vrcp.pop %v318
      %v393 = vmul.f32 %v318, %v392
      %v394 = vsub.f32 1.0, %v393
      %v395 = vmul.f32 %v392, %v394
      %v396 = vadd.f32 %v392, %v395
      %vm397 = vweird.f32 %v318
      %vm398 = vweird.f32 %v392
      %vm399 = vmor %vm397, %vm398
      %v400 = vsel %vm399, %v392, %v396
      %v401 = vand.u32 2147483647, %v318
      %vm402 = vcmp.eq.f32.partialorder %v401, 8.507059e+37
      %v403 = vand.u32 %v318, 2147483648
      %v404 = vor.u32 1.1754944e-38, %v403
      %v405 = vsel %vm402, %v404, %v400
      %v406 = vmul.f32 %v334, %v405
      %v407 = vrcp.pop %v319
      %v408 = vmul.f32 %v319, %v407
      %v409 = vsub.f32 1.0, %v408
      %v410 = vmul.f32 %v407, %v409
      %v411 = vadd.f32 %v407, %v410
      %vm412 = vweird.f32 %v319
      %vm413 = vweird.f32 %v407
      %vm414 = vmor %vm412, %vm413
      %v415 = vsel %vm414, %v407, %v411
      %v416 = vand.u32 2147483647, %v319
      %vm417 = vcmp.eq.f32.partialorder %v416, 8.507059e+37
      %v418 = vand.u32 %v319, 2147483648
      %v419 = vor.u32 1.1754944e-38, %v418
      %v420 = vsel %vm417, %v419, %v415
      %v421 = vmul.f32 %v335, %v420
      %v422 = vrcp.pop %v320
      %v423 = vmul.f32 %v320, %v422
      %v424 = vsub.f32 1.0, %v423
      %v425 = vmul.f32 %v422, %v424
      %v426 = vadd.f32 %v422, %v425
      %vm427 = vweird.f32 %v320
      %vm428 = vweird.f32 %v422
      %vm429 = vmor %vm427, %vm428
      %v430 = vsel %vm429, %v422, %v426
      %v431 = vand.u32 2147483647, %v320
      %vm432 = vcmp.eq.f32.partialorder %v431, 8.507059e+37
      %v433 = vand.u32 %v320, 2147483648
      %v434 = vor.u32 1.1754944e-38, %v433
      %v435 = vsel %vm432, %v434, %v430
      %v436 = vmul.f32 %v336, %v435
      %v437 = vrcp.pop %v321
      %v438 = vmul.f32 %v321, %v437
      %v439 = vsub.f32 1.0, %v438
      %v440 = vmul.f32 %v437, %v439
      %v441 = vadd.f32 %v437, %v440
      %vm442 = vweird.f32 %v321
      %vm443 = vweird.f32 %v437
      %vm444 = vmor %vm442, %vm443
      %v445 = vsel %vm444, %v437, %v441
      %v446 = vand.u32 2147483647, %v321
      %vm447 = vcmp.eq.f32.partialorder %v446, 8.507059e+37
      %v448 = vand.u32 %v321, 2147483648
      %v449 = vor.u32 1.1754944e-38, %v448
      %v450 = vsel %vm447, %v449, %v445
      %v451 = vmul.f32 %v337, %v450
      %v452 = vrcp.pop %v322
      %v453 = vmul.f32 %v322, %v452
      %v454 = vsub.f32 1.0, %v453
      %v455 = vmul.f32 %v452, %v454
      %v456 = vadd.f32 %v452, %v455
      %vm457 = vweird.f32 %v322
      %vm458 = vweird.f32 %v452
      %vm459 = vmor %vm457, %vm458
      %v460 = vsel %vm459, %v452, %v456
      %v461 = vand.u32 2147483647, %v322
      %vm462 = vcmp.eq.f32.partialorder %v461, 8.507059e+37
      %v463 = vand.u32 %v322, 2147483648
      %v464 = vor.u32 1.1754944e-38, %v463
      %v465 = vsel %vm462, %v464, %v460
      %v466 = vmul.f32 %v338, %v465
      %v467 = vrcp.pop %v323
      %v468 = vmul.f32 %v323, %v467
      %v469 = vsub.f32 1.0, %v468
      %v470 = vmul.f32 %v467, %v469
      %v471 = vadd.f32 %v467, %v470
      %vm472 = vweird.f32 %v323
      %vm473 = vweird.f32 %v467
      %vm474 = vmor %vm472, %vm473
      %v475 = vsel %vm474, %v467, %v471
      %v476 = vand.u32 2147483647, %v323
      %vm477 = vcmp.eq.f32.partialorder %v476, 8.507059e+37
      %v478 = vand.u32 %v323, 2147483648
      %v479 = vor.u32 1.1754944e-38, %v478
      %v480 = vsel %vm477, %v479, %v475
      %v481 = vmul.f32 %v339, %v480
      %v482 = vrcp.pop %v324
      %v483 = vmul.f32 %v324, %v482
      %v484 = vsub.f32 1.0, %v483
      %v485 = vmul.f32 %v482, %v484
      %v486 = vadd.f32 %v482, %v485
      %vm487 = vweird.f32 %v324
      %vm488 = vweird.f32 %v482
      %vm489 = vmor %vm487, %vm488
      %v490 = vsel %vm489, %v482, %v486
      %v491 = vand.u32 2147483647, %v324
      %vm492 = vcmp.eq.f32.partialorder %v491, 8.507059e+37
      %v493 = vand.u32 %v324, 2147483648
      %v494 = vor.u32 1.1754944e-38, %v493
      %v495 = vsel %vm492, %v494, %v490
      %v496 = vmul.f32 %v340, %v495
      %v497 = vrcp.pop %v325
      %v498 = vmul.f32 %v325, %v497
      %v499 = vsub.f32 1.0, %v498
      %v500 = vmul.f32 %v497, %v499
      %v501 = vadd.f32 %v497, %v500
      %vm502 = vweird.f32 %v325
      %vm503 = vweird.f32 %v497
      %vm504 = vmor %vm502, %vm503
      %v505 = vsel %vm504, %v497, %v501
      %v506 = vand.u32 2147483647, %v325
      %vm507 = vcmp.eq.f32.partialorder %v506, 8.507059e+37
      %v508 = vand.u32 %v325, 2147483648
      %v509 = vor.u32 1.1754944e-38, %v508
      %v510 = vsel %vm507, %v509, %v505
      %v511 = vmul.f32 %v341, %v510
      %v512 = vrcp.pop %v326
      %v513 = vmul.f32 %v326, %v512
      %v514 = vsub.f32 1.0, %v513
      %v515 = vmul.f32 %v512, %v514
      %v516 = vadd.f32 %v512, %v515
      %vm517 = vweird.f32 %v326
      %vm518 = vweird.f32 %v512
      %vm519 = vmor %vm517, %vm518
      %v520 = vsel %vm519, %v512, %v516
      %v521 = vand.u32 2147483647, %v326
      %vm522 = vcmp.eq.f32.partialorder %v521, 8.507059e+37
      %v523 = vand.u32 %v326, 2147483648
      %v524 = vor.u32 1.1754944e-38, %v523
      %v525 = vsel %vm522, %v524, %v520
      %v526 = vmul.f32 %v342, %v525
      %v527 = vrcp.pop %v327
      %v528 = vmul.f32 %v327, %v527
      %v529 = vsub.f32 1.0, %v528
      %v530 = vmul.f32 %v527, %v529
      %v531 = vadd.f32 %v527, %v530
      %vm532 = vweird.f32 %v327
      %vm533 = vweird.f32 %v527
      %vm534 = vmor %vm532, %vm533
      %v535 = vsel %vm534, %v527, %v531
      %v536 = vand.u32 2147483647, %v327
      %vm537 = vcmp.eq.f32.partialorder %v536, 8.507059e+37
      %v538 = vand.u32 %v327, 2147483648
      %v539 = vor.u32 1.1754944e-38, %v538
      %v540 = vsel %vm537, %v539, %v535
      %v541 = vmul.f32 %v343, %v540
      %v542 = vrcp.pop %v328
      %v543 = vmul.f32 %v328, %v542
      %v544 = vsub.f32 1.0, %v543
      %v545 = vmul.f32 %v542, %v544
      %v546 = vadd.f32 %v542, %v545
      %vm547 = vweird.f32 %v328
      %vm548 = vweird.f32 %v542
      %vm549 = vmor %vm547, %vm548
      %v550 = vsel %vm549, %v542, %v546
      %v551 = vand.u32 2147483647, %v328
      %vm552 = vcmp.eq.f32.partialorder %v551, 8.507059e+37
      %v553 = vand.u32 %v328, 2147483648
      %v554 = vor.u32 1.1754944e-38, %v553
      %v555 = vsel %vm552, %v554, %v550
      %v556 = vmul.f32 %v344, %v555
      %v557 = vrcp.pop %v329
      %v558 = vmul.f32 %v329, %v557
      %v559 = vsub.f32 1.0, %v558
      %v560 = vmul.f32 %v557, %v559
      %v561 = vadd.f32 %v557, %v560
      %vm562 = vweird.f32 %v329
      %vm563 = vweird.f32 %v557
      %vm564 = vmor %vm562, %vm563
      %v565 = vsel %vm564, %v557, %v561
      %v566 = vand.u32 2147483647, %v329
      %vm567 = vcmp.eq.f32.partialorder %v566, 8.507059e+37
      %v568 = vand.u32 %v329, 2147483648
      %v569 = vor.u32 1.1754944e-38, %v568
      %v570 = vsel %vm567, %v569, %v565
      %v571 = vmul.f32 %v345, %v570
      %v572 = vrcp.pop %v330
      %v573 = vmul.f32 %v330, %v572
      %v574 = vsub.f32 1.0, %v573
      %v575 = vmul.f32 %v572, %v574
      %v576 = vadd.f32 %v572, %v575
      %vm577 = vweird.f32 %v330
      %vm578 = vweird.f32 %v572
      %vm579 = vmor %vm577, %vm578
      %v580 = vsel %vm579, %v572, %v576
      %v581 = vand.u32 2147483647, %v330
      %vm582 = vcmp.eq.f32.partialorder %v581, 8.507059e+37
      %v583 = vand.u32 %v330, 2147483648
      %v584 = vor.u32 1.1754944e-38, %v583
      %v585 = vsel %vm582, %v584, %v580
      %v586 = vmul.f32 %v346, %v585
      %v587 = vsel %vm299, 1.0, %v361
      %v588 = vsel %vm300, 1.0, %v376
      %v589 = vsel %vm301, 1.0, %v391
      %v590 = vsel %vm302, 1.0, %v406
      %v591 = vsel %vm303, 1.0, %v421
      %v592 = vsel %vm304, 1.0, %v436
      %v593 = vsel %vm305, 1.0, %v451
      %v594 = vsel %vm306, 1.0, %v466
      %v595 = vsel %vm307, 1.0, %v481
      %v596 = vsel %vm308, 1.0, %v496
      %v597 = vsel %vm309, 1.0, %v511
      %v598 = vsel %vm310, 1.0, %v526
      %v599 = vsel %vm311, 1.0, %v541
      %v600 = vsel %vm312, 1.0, %v556
      %v601 = vsel %vm313, 1.0, %v571
      %v602 = vsel %vm314, 1.0, %v586
      %v603 = vmul.f32 %v218, %v587
      %v604 = vmul.f32 %v219, %v588
      %v605 = vmul.f32 %v220, %v589
      %v606 = vmul.f32 %v221, %v590
      %v607 = vmul.f32 %v222, %v591
      %v608 = vmul.f32 %v223, %v592
      %v609 = vmul.f32 %v224, %v593
      %v610 = vmul.f32 %v225, %v594
      %v611 = vmul.f32 %v226, %v595
      %v612 = vmul.f32 %v227, %v596
      %v613 = vmul.f32 %v228, %v597
      %v614 = vmul.f32 %v229, %v598
      %v615 = vmul.f32 %v230, %v599
      %v616 = vmul.f32 %v231, %v600
      %v617 = vmul.f32 %v232, %v601
      %v618 = vmul.f32 %v233, %v602
      %v619 = vpack.c.bf16 %v604, %v603
      %v620 = vpack.c.bf16 %v606, %v605
      %v621 = vpack.c.bf16 %v608, %v607
      %v622 = vpack.c.bf16 %v610, %v609
      %v623 = vpack.c.bf16 %v612, %v611
      %v624 = vpack.c.bf16 %v614, %v613
      %v625 = vpack.c.bf16 %v616, %v615
      %v626 = vpack.c.bf16 %v618, %v617
      %v627 = vld [vmem:[%s1] sm:$0xf]
      %v628 = vld [vmem:[%s1 + $0x4] sm:$0xf]
      %v629 = vld [vmem:[%s1 + $0x8] sm:$0xf]
      %v630 = vld [vmem:[%s1 + $0xc] sm:$0xf]
      %v635 = vunpack.c.l.b16 %v627
      %v636 = vunpack.c.l.b16 %v628
      %v637 = vunpack.c.l.b16 %v629
      %v638 = vunpack.c.l.b16 %v630
      %v639 = vpack.c.b16 %v636, %v635
      %v640 = vpack.c.b16 %v638, %v637
      %v644 = vsel %vm250, %v619, 0
      %v647 = vsel %vm250, %v620, 0
      %v650 = vsel %vm250, %v621, 0
      %v653 = vsel %vm250, %v622, 0
      %v656 = vsel %vm250, %v623, 0
      %v659 = vsel %vm250, %v624, 0
      %v662 = vsel %vm250, %v625, 0
      %v665 = vsel %vm250, %v626, 0
      %667 = vmatpush.bf16.msra.mxu0 0
      %668 = vmatpush.bf16.msra.mxu0 0
      %669 = vmatpush.bf16.msra.mxu0 0
      %670 = vmatpush.bf16.msra.mxu0 0
      %671 = vmatpush.bf16.msra.mxu0 0
      %672 = vmatpush.bf16.msra.mxu0 0
      %673 = vmatpush.bf16.msra.mxu0 %v640
      %674 = vmatpush.bf16.msra.mxu0 %v639
      %675 = vmatmul.bf16.gmra.mxu0 %v644
      %v676 = vpop.f32.mrf.mxu0
      %v677 = vadd.f32 0.0, %v676
      %v678 = vpop.f32.mrf.mxu0
      %v679 = vadd.f32 0.0, %v678
      %680 = vmatmul.bf16.gmra.mxu0 %v647
      %v681 = vpop.f32.mrf.mxu0
      %v682 = vadd.f32 0.0, %v681
      %v683 = vpop.f32.mrf.mxu0
      %v684 = vadd.f32 0.0, %v683
      %685 = vmatmul.bf16.gmra.mxu0 %v650
      %v686 = vpop.f32.mrf.mxu0
      %v687 = vadd.f32 0.0, %v686
      %v688 = vpop.f32.mrf.mxu0
      %v689 = vadd.f32 0.0, %v688
      %690 = vmatmul.bf16.gmra.mxu0 %v653
      %v691 = vpop.f32.mrf.mxu0
      %v692 = vadd.f32 0.0, %v691
      %v693 = vpop.f32.mrf.mxu0
      %v694 = vadd.f32 0.0, %v693
      %695 = vmatmul.bf16.gmra.mxu0 %v656
      %v696 = vpop.f32.mrf.mxu0
      %v697 = vadd.f32 0.0, %v696
      %v698 = vpop.f32.mrf.mxu0
      %v699 = vadd.f32 0.0, %v698
      %700 = vmatmul.bf16.gmra.mxu0 %v659
      %v701 = vpop.f32.mrf.mxu0
      %v702 = vadd.f32 0.0, %v701
      %v703 = vpop.f32.mrf.mxu0
      %v704 = vadd.f32 0.0, %v703
      %705 = vmatmul.bf16.gmra.mxu0 %v662
      %v706 = vpop.f32.mrf.mxu0
      %v707 = vadd.f32 0.0, %v706
      %v708 = vpop.f32.mrf.mxu0
      %v709 = vadd.f32 0.0, %v708
      %710 = vmatmul.bf16.gmra.mxu0 %v665
      %v711 = vpop.f32.mrf.mxu0
      %v712 = vadd.f32 0.0, %v711
      %v713 = vpop.f32.mrf.mxu0
      %v714 = vadd.f32 0.0, %v713
      %715 = vdwg.mxu0
      %v716 = vtanh.pop %v677
      %v717 = vtanh.pop %v679
      %v718 = vtanh.pop %v682
      %v719 = vtanh.pop %v684
      %v720 = vtanh.pop %v687
      %v721 = vtanh.pop %v689
      %v722 = vtanh.pop %v692
      %v723 = vtanh.pop %v694
      %v724 = vtanh.pop %v697
      %v725 = vtanh.pop %v699
      %v726 = vtanh.pop %v702
      %v727 = vtanh.pop %v704
      %v728 = vtanh.pop %v707
      %v729 = vtanh.pop %v709
      %v730 = vtanh.pop %v712
      %v731 = vtanh.pop %v714
      %v732 = vpack.c.bf16 %v717, %v716
      %v733 = vpack.c.bf16 %v719, %v718
      %v734 = vpack.c.bf16 %v721, %v720
      %v735 = vpack.c.bf16 %v723, %v722
      %v736 = vpack.c.bf16 %v725, %v724
      %v737 = vpack.c.bf16 %v727, %v726
      %v738 = vpack.c.bf16 %v729, %v728
      %v739 = vpack.c.bf16 %v731, %v730
      %v740 = vld [vmem:[%s2] sm:$0xf]
      %v741 = vld [vmem:[%s2 + $0x4] sm:$0xf]
      %v742 = vld [vmem:[%s2 + $0x8] sm:$0xf]
      %v743 = vld [vmem:[%s2 + $0xc] sm:$0xf]
      %v744 = vld [vmem:[%s2 + $0x10] sm:$0xf]
      %v745 = vld [vmem:[%s2 + $0x14] sm:$0xf]
      %v746 = vld [vmem:[%s2 + $0x18] sm:$0xf]
      %v747 = vld [vmem:[%s2 + $0x1c] sm:$0xf]
      %v748 = vld [vmem:[%s2 + $0x20] sm:$0xf]
      %v749 = vld [vmem:[%s2 + $0x24] sm:$0xf]
      %v750 = vld [vmem:[%s2 + $0x28] sm:$0xf]
      %v751 = vld [vmem:[%s2 + $0x2c] sm:$0xf]
      %v752 = vld [vmem:[%s2 + $0x30] sm:$0xf]
      %v753 = vld [vmem:[%s2 + $0x34] sm:$0xf]
      %v754 = vld [vmem:[%s2 + $0x38] sm:$0xf]
      %v755 = vld [vmem:[%s2 + $0x3c] sm:$0xf]
      %v772 = vunpack.c.l.b16 %v740
      %v773 = vunpack.c.l.b16 %v741
      %v774 = vunpack.c.l.b16 %v742
      %v775 = vunpack.c.l.b16 %v743
      %v776 = vunpack.c.l.b16 %v744
      %v777 = vunpack.c.l.b16 %v745
      %v778 = vunpack.c.l.b16 %v746
      %v779 = vunpack.c.l.b16 %v747
      %v780 = vunpack.c.l.b16 %v748
      %v781 = vunpack.c.l.b16 %v749
      %v782 = vunpack.c.l.b16 %v750
      %v783 = vunpack.c.l.b16 %v751
      %v784 = vunpack.c.l.b16 %v752
      %v785 = vunpack.c.l.b16 %v753
      %v786 = vunpack.c.l.b16 %v754
      %v787 = vunpack.c.l.b16 %v755
      %v788 = vpack.c.b16 %v773, %v772
      %v789 = vpack.c.b16 %v775, %v774
      %v790 = vpack.c.b16 %v777, %v776
      %v791 = vpack.c.b16 %v779, %v778
      %v792 = vpack.c.b16 %v781, %v780
      %v793 = vpack.c.b16 %v783, %v782
      %v794 = vpack.c.b16 %v785, %v784
      %v795 = vpack.c.b16 %v787, %v786
      %804 = vmatpush.bf16.msra.mxu0 %v795
      %805 = vmatpush.bf16.msra.mxu0 %v794
      %806 = vmatpush.bf16.msra.mxu0 %v793
      %807 = vmatpush.bf16.msra.mxu0 %v792
      %808 = vmatpush.bf16.msra.mxu0 %v791
      %809 = vmatpush.bf16.msra.mxu0 %v790
      %810 = vmatpush.bf16.msra.mxu0 %v789
      %811 = vmatpush.bf16.msra.mxu0 %v788
      %812 = vmatmul.bf16.gmra.mxu0 %v732
      %v813 = vpop.f32.mrf.mxu0
      %v814 = vadd.f32 0.0, %v813
      %v815 = vpop.f32.mrf.mxu0
      %v816 = vadd.f32 0.0, %v815
      %817 = vmatmul.bf16.gmra.mxu0 %v733
      %v818 = vpop.f32.mrf.mxu0
      %v819 = vadd.f32 0.0, %v818
      %v820 = vpop.f32.mrf.mxu0
      %v821 = vadd.f32 0.0, %v820
      %822 = vmatmul.bf16.gmra.mxu0 %v734
      %v823 = vpop.f32.mrf.mxu0
      %v824 = vadd.f32 0.0, %v823
      %v825 = vpop.f32.mrf.mxu0
      %v826 = vadd.f32 0.0, %v825
      %827 = vmatmul.bf16.gmra.mxu0 %v735
      %v828 = vpop.f32.mrf.mxu0
      %v829 = vadd.f32 0.0, %v828
      %v830 = vpop.f32.mrf.mxu0
      %v831 = vadd.f32 0.0, %v830
      %832 = vmatmul.bf16.gmra.mxu0 %v736
      %v833 = vpop.f32.mrf.mxu0
      %v834 = vadd.f32 0.0, %v833
      %v835 = vpop.f32.mrf.mxu0
      %v836 = vadd.f32 0.0, %v835
      %837 = vmatmul.bf16.gmra.mxu0 %v737
      %v838 = vpop.f32.mrf.mxu0
      %v839 = vadd.f32 0.0, %v838
      %v840 = vpop.f32.mrf.mxu0
      %v841 = vadd.f32 0.0, %v840
      %842 = vmatmul.bf16.gmra.mxu0 %v738
      %v843 = vpop.f32.mrf.mxu0
      %v844 = vadd.f32 0.0, %v843
      %v845 = vpop.f32.mrf.mxu0
      %v846 = vadd.f32 0.0, %v845
      %847 = vmatmul.bf16.gmra.mxu0 %v739
      %v848 = vpop.f32.mrf.mxu0
      %v849 = vadd.f32 0.0, %v848
      %v850 = vpop.f32.mrf.mxu0
      %v851 = vadd.f32 0.0, %v850
      %852 = vdwg.mxu0
      %v853 = vtanh.pop %v814
      %v854 = vtanh.pop %v816
      %v855 = vtanh.pop %v819
      %v856 = vtanh.pop %v821
      %v857 = vtanh.pop %v824
      %v858 = vtanh.pop %v826
      %v859 = vtanh.pop %v829
      %v860 = vtanh.pop %v831
      %v861 = vtanh.pop %v834
      %v862 = vtanh.pop %v836
      %v863 = vtanh.pop %v839
      %v864 = vtanh.pop %v841
      %v865 = vtanh.pop %v844
      %v866 = vtanh.pop %v846
      %v867 = vtanh.pop %v849
      %v868 = vtanh.pop %v851
      %v869 = vpack.c.bf16 %v854, %v853
      %v870 = vpack.c.bf16 %v856, %v855
      %v871 = vpack.c.bf16 %v858, %v857
      %v872 = vpack.c.bf16 %v860, %v859
      %v873 = vpack.c.bf16 %v862, %v861
      %v874 = vpack.c.bf16 %v864, %v863
      %v875 = vpack.c.bf16 %v866, %v865
      %v876 = vpack.c.bf16 %v868, %v867
      %v877 = vld [vmem:[%s3] sm:$0xf]
      %v878 = vld [vmem:[%s3 + $0x4] sm:$0xf]
      %v879 = vld [vmem:[%s3 + $0x8] sm:$0xf]
      %v880 = vld [vmem:[%s3 + $0xc] sm:$0xf]
      %v881 = vld [vmem:[%s3 + $0x10] sm:$0xf]
      %v882 = vld [vmem:[%s3 + $0x14] sm:$0xf]
      %v883 = vld [vmem:[%s3 + $0x18] sm:$0xf]
      %v884 = vld [vmem:[%s3 + $0x1c] sm:$0xf]
      %v885 = vld [vmem:[%s3 + $0x20] sm:$0xf]
      %v886 = vld [vmem:[%s3 + $0x24] sm:$0xf]
      %v887 = vld [vmem:[%s3 + $0x28] sm:$0xf]
      %v888 = vld [vmem:[%s3 + $0x2c] sm:$0xf]
      %v889 = vld [vmem:[%s3 + $0x30] sm:$0xf]
      %v890 = vld [vmem:[%s3 + $0x34] sm:$0xf]
      %v891 = vld [vmem:[%s3 + $0x38] sm:$0xf]
      %v892 = vld [vmem:[%s3 + $0x3c] sm:$0xf]
      %v909 = vunpack.c.l.b16 %v877
      %v910 = vunpack.c.l.b16 %v878
      %v911 = vunpack.c.l.b16 %v879
      %v912 = vunpack.c.l.b16 %v880
      %v913 = vunpack.c.l.b16 %v881
      %v914 = vunpack.c.l.b16 %v882
      %v915 = vunpack.c.l.b16 %v883
      %v916 = vunpack.c.l.b16 %v884
      %v917 = vunpack.c.l.b16 %v885
      %v918 = vunpack.c.l.b16 %v886
      %v919 = vunpack.c.l.b16 %v887
      %v920 = vunpack.c.l.b16 %v888
      %v921 = vunpack.c.l.b16 %v889
      %v922 = vunpack.c.l.b16 %v890
      %v923 = vunpack.c.l.b16 %v891
      %v924 = vunpack.c.l.b16 %v892
      %v925 = vpack.c.b16 %v910, %v909
      %v926 = vpack.c.b16 %v912, %v911
      %v927 = vpack.c.b16 %v914, %v913
      %v928 = vpack.c.b16 %v916, %v915
      %v929 = vpack.c.b16 %v918, %v917
      %v930 = vpack.c.b16 %v920, %v919
      %v931 = vpack.c.b16 %v922, %v921
      %v932 = vpack.c.b16 %v924, %v923
      %941 = vmatpush.bf16.msra.mxu0 %v932
      %942 = vmatpush.bf16.msra.mxu0 %v931
      %943 = vmatpush.bf16.msra.mxu0 %v930
      %944 = vmatpush.bf16.msra.mxu0 %v929
      %945 = vmatpush.bf16.msra.mxu0 %v928
      %946 = vmatpush.bf16.msra.mxu0 %v927
      %947 = vmatpush.bf16.msra.mxu0 %v926
      %948 = vmatpush.bf16.msra.mxu0 %v925
      %949 = vmatmul.bf16.gmra.mxu0 %v869
      %v950 = vpop.f32.mrf.mxu0
      %v951 = vadd.f32 0.0, %v950
      %v952 = vpop.f32.mrf.mxu0
      %v953 = vadd.f32 0.0, %v952
      %954 = vmatmul.bf16.gmra.mxu0 %v870
      %v955 = vpop.f32.mrf.mxu0
      %v956 = vadd.f32 0.0, %v955
      %v957 = vpop.f32.mrf.mxu0
      %v958 = vadd.f32 0.0, %v957
      %959 = vmatmul.bf16.gmra.mxu0 %v871
      %v960 = vpop.f32.mrf.mxu0
      %v961 = vadd.f32 0.0, %v960
      %v962 = vpop.f32.mrf.mxu0
      %v963 = vadd.f32 0.0, %v962
      %964 = vmatmul.bf16.gmra.mxu0 %v872
      %v965 = vpop.f32.mrf.mxu0
      %v966 = vadd.f32 0.0, %v965
      %v967 = vpop.f32.mrf.mxu0
      %v968 = vadd.f32 0.0, %v967
      %969 = vmatmul.bf16.gmra.mxu0 %v873
      %v970 = vpop.f32.mrf.mxu0
      %v971 = vadd.f32 0.0, %v970
      %v972 = vpop.f32.mrf.mxu0
      %v973 = vadd.f32 0.0, %v972
      %974 = vmatmul.bf16.gmra.mxu0 %v874
      %v975 = vpop.f32.mrf.mxu0
      %v976 = vadd.f32 0.0, %v975
      %v977 = vpop.f32.mrf.mxu0
      %v978 = vadd.f32 0.0, %v977
      %979 = vmatmul.bf16.gmra.mxu0 %v875
      %v980 = vpop.f32.mrf.mxu0
      %v981 = vadd.f32 0.0, %v980
      %v982 = vpop.f32.mrf.mxu0
      %v983 = vadd.f32 0.0, %v982
      %984 = vmatmul.bf16.gmra.mxu0 %v876
      %v985 = vpop.f32.mrf.mxu0
      %v986 = vadd.f32 0.0, %v985
      %v987 = vpop.f32.mrf.mxu0
      %v988 = vadd.f32 0.0, %v987
      %989 = vdwg.mxu0
      %v990 = vmax.f32 %v951, 0.0
      %v991 = vmax.f32 %v953, 0.0
      %v992 = vmax.f32 %v956, 0.0
      %v993 = vmax.f32 %v958, 0.0
      %v994 = vmax.f32 %v961, 0.0
      %v995 = vmax.f32 %v963, 0.0
      %v996 = vmax.f32 %v966, 0.0
      %v997 = vmax.f32 %v968, 0.0
      %v998 = vmax.f32 %v971, 0.0
      %v999 = vmax.f32 %v973, 0.0
      %v1000 = vmax.f32 %v976, 0.0
      %v1001 = vmax.f32 %v978, 0.0
      %v1002 = vmax.f32 %v981, 0.0
      %v1003 = vmax.f32 %v983, 0.0
      %v1004 = vmax.f32 %v986, 0.0
      %v1005 = vmax.f32 %v988, 0.0
      %v1006 = vadd.f32 %v990, 0.005
      %v1007 = vadd.f32 %v991, 0.005
      %v1008 = vadd.f32 %v992, 0.005
      %v1009 = vadd.f32 %v993, 0.005
      %v1010 = vadd.f32 %v994, 0.005
      %v1011 = vadd.f32 %v995, 0.005
      %v1012 = vadd.f32 %v996, 0.005
      %v1013 = vadd.f32 %v997, 0.005
      %v1014 = vadd.f32 %v998, 0.005
      %v1015 = vadd.f32 %v999, 0.005
      %v1016 = vadd.f32 %v1000, 0.005
      %v1017 = vadd.f32 %v1001, 0.005
      %v1018 = vadd.f32 %v1002, 0.005
      %v1019 = vadd.f32 %v1003, 0.005
      %v1020 = vadd.f32 %v1004, 0.005
      %v1021 = vadd.f32 %v1005, 0.005
      %1022 = vst [vmem:[%s199] sm:$0xff] %v1006
      %1023 = vst [vmem:[%s199 + $0x8] sm:$0xff] %v1007
      %1024 = vst [vmem:[%s199 + $0x10] sm:$0xff] %v1008
      %1025 = vst [vmem:[%s199 + $0x18] sm:$0xff] %v1009
      %1026 = vst [vmem:[%s199 + $0x20] sm:$0xff] %v1010
      %1027 = vst [vmem:[%s199 + $0x28] sm:$0xff] %v1011
      %1028 = vst [vmem:[%s199 + $0x30] sm:$0xff] %v1012
      %1029 = vst [vmem:[%s199 + $0x38] sm:$0xff] %v1013
      %1030 = vst [vmem:[%s199 + $0x40] sm:$0xff] %v1014
      %1031 = vst [vmem:[%s199 + $0x48] sm:$0xff] %v1015
      %1032 = vst [vmem:[%s199 + $0x50] sm:$0xff] %v1016
      %1033 = vst [vmem:[%s199 + $0x58] sm:$0xff] %v1017
      %1034 = vst [vmem:[%s199 + $0x60] sm:$0xff] %v1018
      %1035 = vst [vmem:[%s199 + $0x68] sm:$0xff] %v1019
      %1036 = vst [vmem:[%s199 + $0x70] sm:$0xff] %v1020
      %1037 = vst [vmem:[%s199 + $0x78] sm:$0xff] %v1021
      %s1038 = smul.u32 16, %s15
      %p1039 = scmp.lt.s32.totalorder %s1038, 31
      %s1040 = scalar_select %p1039, %s1038, 31
      %s1041 = smul.addr %s1040, 8
      %s1042 = scalar_lea.vmem %s4, %s1041
      // Predicated region
      $region37: #{encoder_forward.1} parent=35 // pred_check
        %p1043 = pneg %p122
      $region38: #{encoder_forward.1} parent=35 // pred_check_branch
        %1045 = sbr.rel (%p1043) target = $region40
      $region39: #{encoder_forward.1} parent=35 // pred_region
        %s1046 = smul.u32 16, %s15
      $region40: #{encoder_forward.1} parent=35 // pred_fallthru
        _
    $region36: #{encoder_forward.1} parent=5 // pred_fallthru
      _
    %p1047 = scmp.le.s32.totalorder 2, %s10
    // Predicated region
    $region41: #{encoder_forward.1} parent=5 // pred_check
      %p1048 = pneg %p1047
    $region42: #{encoder_forward.1} parent=5 // pred_check_branch
      %1050 = sbr.rel (%p1048) target = $region44
    $region43: #{encoder_forward.1} parent=5 // pred_region
      %s1051 = ssub.s32 %s10, 2
      // Predicated region
      $region45: #{encoder_forward.1} parent=43 // pred_check
        %p1052 = pneg %p128
      $region46: #{encoder_forward.1} parent=43 // pred_check_branch
        %1054 = sbr.rel (%p1052) target = $region48
      $region47: #{encoder_forward.1} parent=43 // pred_region
        %s1055 = smul.u32 16, %s16
        %p1056 = scmp.lt.s32.totalorder %s1055, 31
        %s1057 = scalar_select %p1056, %s1055, 31
        %s1058 = smul.addr %s1057, 8
        %s1059 = scalar_lea.vmem %s4, %s1058
      $region48: #{encoder_forward.1} parent=43 // pred_fallthru
        _
    $region44: #{encoder_forward.1} parent=5 // pred_fallthru
      _
  $region6: #{encoder_forward.1} parent=0 // loop_footer
    %s14 = sadd.s32 1, %s10
  $region7: #{encoder_forward.1} parent=0 // loop_footer_branch
    %9 = sbr.rel target = $region3
  $region8: #{encoder_forward.1} parent=0 // loop_exit
    _

</llo_original>
